<compile_context>
chip_gen: v7x
topology: tpu7x:2x2x1
jax: 0.10.0
libtpu: 0.0.40
codegen_flags: <defaults>
</compile_context>

<pallas_src>
import jax
import jax.numpy as jnp
from jax import lax
from jax.experimental import pallas as pl
from jax.experimental.pallas import tpu as pltpu


def _log_sigmoid(x):
    # numerically stable log(sigmoid(x)) = min(x, 0) - log1p(exp(-|x|))
    return jnp.minimum(x, 0.0) - jnp.log1p(jnp.exp(-jnp.abs(x)))


def _pick_tile(n, target):
    """Largest tile <= target that divides n and is a multiple of 8 (or n)."""
    t = min(n, target)
    while t > 8 and (n % t != 0 or t % 8 != 0):
        t -= 8
    if n % t != 0 or (t != n and t % 8 != 0):
        t = n
    return t


def _make_sb_kernel(tq, tk, nk, scale, eps):
    def kernel(q_ref, k_ref, v_ref, tril_ref, hb_ref, w_ref, o_ref,
               carry_ref, rowsum_ref, acc_ref):
        qi = pl.program_id(2)
        kv = pl.program_id(3)
        q0 = qi * tq
        c0 = (nk - 1 - kv) * tk          # kv tiles streamed right -> left

        @pl.when(kv == 0)
        def _init():
            carry_ref[...] = jnp.zeros_like(carry_ref)
            rowsum_ref[...] = jnp.zeros_like(rowsum_ref)
            acc_ref[...] = jnp.zeros_like(acc_ref)

        # Tiles entirely to the right of every query row are fully masked
        # (att == 0, log_beta == 0): skip all compute.
        @pl.when(c0 < q0 + tq)
        def _compute():
            q = q_ref[...]
            k = k_ref[...]
            v = v_ref[...]

            # fold 1/sqrt(d) into q; keep native-dtype operands into the MXU,
            # accumulate logits in f32.
            qs = q * scale
            logits = lax.dot_general(
                qs, k, (((1,), (1,)), ((), ())),
                preferred_element_type=jnp.float32)

            # per-tile causal mask only (never (n, n))
            row = q0 + lax.broadcasted_iota(jnp.int32, (tq, tk), 0)
            col = c0 + lax.broadcasted_iota(jnp.int32, (tq, tk), 1)
            masked = col >= row

            ls = _log_sigmoid(logits)                  # one transcendental pass
            log_z = jnp.where(masked, -100000.0, ls)
            log_beta = jnp.where(masked, 0.0, ls - logits)  # logsig(-x)=logsig(x)-x

            # in-tile strict suffix sum via a small resident (tk, tk) tril
            # matmul on the MXU; columns to the right handled by the carry.
            suffix = jnp.dot(log_beta, tril_ref[...],
                             preferred_element_type=jnp.float32)
            re_cum = carry_ref[...] + suffix

            att = jnp.exp(log_z + re_cum)
            acc_ref[...] += jnp.dot(att.astype(v.dtype), v,
                                    preferred_element_type=jnp.float32)
            rowsum_ref[...] += jnp.sum(att, axis=-1, keepdims=True)
            carry_ref[...] += jnp.sum(log_beta, axis=-1, keepdims=True)

        @pl.when(kv == nk - 1)
        def _finalize():
            rem = 1.0 - rowsum_ref[...]                        # (tq, 1)
            out = acc_ref[...] + rem * hb_ref[...].astype(jnp.float32)
            # fused per-head GroupRMSNorm (one group per head)
            # TODO(synk): eps assumed 1e-6 (xmixers GroupRMSNorm default).
            ms = jnp.mean(out * out, axis=-1, keepdims=True)
            out = out * lax.rsqrt(ms + eps) * w_ref[...].astype(jnp.float32)
            o_ref[...] = out.astype(o_ref.dtype)

    return kernel


def sb_attention_pallas(q, k, v, head_bias, norm_weight, *, tq=256, tk=256):
    """q, k, v: (b, h, n, d).  head_bias, norm_weight: (h, d)."""
    b, h, n, d = q.shape
    tq = _pick_tile(n, tq)
    tk = _pick_tile(n, tk)
    nq, nk = n // tq, n // tk
    scale = d ** (-0.5)

    hb = head_bias.reshape(h, 1, d)
    nw = norm_weight.reshape(h, 1, d)
    tril = jnp.tril(jnp.ones((tk, tk), jnp.float32), -1)   # [j, k] = 1 iff j > k

    q_spec = pl.BlockSpec((None, None, tq, d),
                          lambda bi, hi, qi, ki: (bi, hi, qi, 0))
    kv_spec = pl.BlockSpec((None, None, tk, d),
                           lambda bi, hi, qi, ki: (bi, hi, nk - 1 - ki, 0))
    tril_spec = pl.BlockSpec((tk, tk), lambda bi, hi, qi, ki: (0, 0))
    per_head_spec = pl.BlockSpec((None, 1, d), lambda bi, hi, qi, ki: (hi, 0, 0))
    out_spec = pl.BlockSpec((None, None, tq, d),
                            lambda bi, hi, qi, ki: (bi, hi, qi, 0))

    kernel = _make_sb_kernel(tq, tk, nk, scale, 1e-6)

    return pl.pallas_call(
        kernel,
        out_shape=jax.ShapeDtypeStruct((b, h, n, d), q.dtype),
        grid_spec=pltpu.PrefetchScalarGridSpec(
            num_scalar_prefetch=0,
            grid=(b, h, nq, nk),
            in_specs=[q_spec, kv_spec, kv_spec, tril_spec,
                      per_head_spec, per_head_spec],
            out_specs=out_spec,
            scratch_shapes=[
                pltpu.VMEM((tq, 1), jnp.float32),   # carry: suffix sum of log_beta
                pltpu.VMEM((tq, 1), jnp.float32),   # running att row-sum (for rem)
                pltpu.VMEM((tq, d), jnp.float32),   # output accumulator (att @ v)
            ]),
        compiler_params=pltpu.CompilerParams(
            dimension_semantics=("parallel", "parallel", "parallel", "arbitrary"),
            vmem_limit_bytes=48 * 1024 * 1024),
    )(q, k, v, tril, hb, nw)


def init_params(key, embed_dim, num_heads, init_std=0.02):
    head_dim = embed_dim // num_heads
    ks = jax.random.split(key, 4)
    # nn.Linear weights stored as (out_features, in_features); synthetic init.
    params = {
        "wq": jax.random.normal(ks[0], (embed_dim, embed_dim), jnp.float32) * init_std,
        "wk": jax.random.normal(ks[1], (embed_dim, embed_dim), jnp.float32) * init_std,
        "wv": jax.random.normal(ks[2], (embed_dim, embed_dim), jnp.float32) * init_std,
        "wo": jax.random.normal(ks[3], (embed_dim, embed_dim), jnp.float32) * init_std,
        "head_bias": jnp.zeros((num_heads, head_dim), jnp.float32),   # setup_head_bias
        "norm_weight": jnp.ones((num_heads, head_dim), jnp.float32),  # GroupRMSNorm weight
    }
    return params


def stickbreaking_attention_forward(x, params, num_heads, *, tq=256, tk=256):
    b, n, d_model = x.shape
    head_dim = d_model // num_heads

    q = x @ params["wq"].T
    k = x @ params["wk"].T
    v = x @ params["wv"].T

    # TODO(synk): a (b, n, h, d)-direct BlockSpec would drop these transposes,
    # but with head_dim < 128 the per-head last-two block dims violate the
    # (8, 128) tiling rule; keep the portable (b, h, n, d) layout here.
    def to_bhnd(t):
        return t.reshape(b, n, num_heads, head_dim).transpose(0, 2, 1, 3)

    q, k, v = map(to_bhnd, (q, k, v))

    o = sb_attention_pallas(q, k, v, params["head_bias"], params["norm_weight"],
                            tq=tq, tk=tk)

    o = o.transpose(0, 2, 1, 3).reshape(b, n, d_model)
    o = o @ params["wo"].T
    return o


def _reference_forward(x, params, num_heads):
    """Pure-JAX reference mirroring the PyTorch sb_attn + forward."""
    b, n, d_model = x.shape
    head_dim = d_model // num_heads
    q = (x @ params["wq"].T).reshape(b, n, num_heads, head_dim).transpose(0, 2, 1, 3)
    k = (x @ params["wk"].T).reshape(b, n, num_heads, head_dim).transpose(0, 2, 1, 3)
    v = (x @ params["wv"].T).reshape(b, n, num_heads, head_dim).transpose(0, 2, 1, 3)
    scale = head_dim ** (-0.5)
    logits = jnp.einsum("bhid,bhjd->bhij", q, k) * scale
    row = jnp.arange(n)[:, None]
    col = jnp.arange(n)[None, :]
    mask = col >= row
    log_z = jnp.where(mask, -100000.0, jax.nn.log_sigmoid(logits))
    log_beta = jnp.where(mask, 0.0, jax.nn.log_sigmoid(-logits))
    cum_weight = (row > col).astype(jnp.float32)
    re_cum = jnp.einsum("bhij,jk->bhik", log_beta, cum_weight)
    att = jnp.exp(log_z + re_cum)
    o = jnp.einsum("bhij,bhjd->bhid", att, v)
    rem = 1.0 - att.sum(-1)
    o = o + rem[..., None] * params["head_bias"][None, :, None, :]
    o = o.transpose(0, 2, 1, 3)  # (b, n, h, d)
    ms = jnp.mean(o * o, axis=-1, keepdims=True)
    o = o * lax.rsqrt(ms + 1e-6) * params["norm_weight"][None, None, :, :]
    o = o.reshape(b, n, d_model)
    return o @ params["wo"].T


if __name__ == "__main__":
    # Small shapes, but seq/tiles chosen so the multi-tile carry, the masked
    # diagonal tiles and the fully-skipped tiles are all exercised.
    batch, seq, embed_dim, num_heads = 2, 64, 32, 4

    key = jax.random.PRNGKey(0)
    k_x, k_p = jax.random.split(key)
    x = jax.random.normal(k_x, (batch, seq, embed_dim), jnp.float32)
    params = init_params(k_p, embed_dim, num_heads)

    out = stickbreaking_attention_forward(x, params, num_heads, tq=16, tk=16)
    out = jax.block_until_ready(out)

    ref = _reference_forward(x, params, num_heads)
    assert out.shape == (batch, seq, embed_dim)
    assert jnp.allclose(out, ref, atol=1e-3, rtol=1e-3), "mismatch vs reference"

    print("KERNEL_OK")
</pallas_src>

<mosaic_0001>
module attributes {stable_mosaic.version = 11 : i64} {
  func.func @kernel(%arg0: i32, %arg1: i32, %arg2: i32, %arg3: i32, %arg4: memref<1x1x16x8xf32, #tpu.memory_space<vmem>>, %arg5: memref<1x1x16x8xf32, #tpu.memory_space<vmem>>, %arg6: memref<1x1x16x8xf32, #tpu.memory_space<vmem>>, %arg7: memref<16x16xf32, #tpu.memory_space<vmem>>, %arg8: memref<1x1x8xf32, #tpu.memory_space<vmem>>, %arg9: memref<1x1x8xf32, #tpu.memory_space<vmem>>, %arg10: memref<1x1x16x8xf32, #tpu.memory_space<vmem>>, %arg11: memref<16x1xf32, #tpu.memory_space<vmem>>, %arg12: memref<16x1xf32, #tpu.memory_space<vmem>>, %arg13: memref<16x8xf32, #tpu.memory_space<vmem>>) attributes {dimension_semantics = [#tpu.dimension_semantics<parallel>, #tpu.dimension_semantics<parallel>, #tpu.dimension_semantics<parallel>, #tpu.dimension_semantics<arbitrary>], iteration_bounds = array<i64: 2, 4, 4, 4>, scalar_prefetch = 0 : i64, scratch_operands = 3 : i64, tpu.core_type = #tpu.core_type<tc>, window_params = [{transform_indices = @transform_0, window_bounds = array<i64: 1, 1, 16, 8>}, {transform_indices = @transform_1, window_bounds = array<i64: 1, 1, 16, 8>}, {transform_indices = @transform_2, window_bounds = array<i64: 1, 1, 16, 8>}, {pipeline_mode = #tpu.pipeline_mode<synchronous>, transform_indices = @transform_3, window_bounds = array<i64: 16, 16>}, {transform_indices = @transform_4, window_bounds = array<i64: 1, 1, 8>}, {transform_indices = @transform_5, window_bounds = array<i64: 1, 1, 8>}, {transform_indices = @transform_6, window_bounds = array<i64: 1, 1, 16, 8>}]} {
    %c16_i32 = arith.constant 16 : i32
    %0 = arith.muli %arg2, %c16_i32 : i32
    %c3_i32 = arith.constant 3 : i32
    %1 = arith.subi %c3_i32, %arg3 : i32
    %c16_i32_0 = arith.constant 16 : i32
    %2 = arith.muli %1, %c16_i32_0 : i32
    %c0_i32 = arith.constant 0 : i32
    %3 = arith.cmpi eq, %arg3, %c0_i32 : i32
    %4 = arith.extui %3 : i1 to i32
    %c0_i32_1 = arith.constant 0 : i32
    %5 = arith.cmpi ne, %4, %c0_i32_1 : i32
    scf.if %5 {
      %cst = arith.constant 0.000000e+00 : f32
      %13 = vector.broadcast %cst : f32 to vector<16x1xf32>
      %c0 = arith.constant 0 : index
      %c0_6 = arith.constant 0 : index
      %14 = vector.load %arg11[%c0, %c0_6] : memref<16x1xf32, #tpu.memory_space<vmem>>, vector<16x1xf32>
      tpu.vector_store %arg11[%c0, %c0_6], %13 {strides = array<i32>} : memref<16x1xf32, #tpu.memory_space<vmem>>, vector<16x1xf32>,
      %cst_7 = arith.constant 0.000000e+00 : f32
      %15 = vector.broadcast %cst_7 : f32 to vector<16x1xf32>
      %c0_8 = arith.constant 0 : index
      %c0_9 = arith.constant 0 : index
      %16 = vector.load %arg12[%c0_8, %c0_9] : memref<16x1xf32, #tpu.memory_space<vmem>>, vector<16x1xf32>
      tpu.vector_store %arg12[%c0_8, %c0_9], %15 {strides = array<i32>} : memref<16x1xf32, #tpu.memory_space<vmem>>, vector<16x1xf32>,
      %cst_10 = arith.constant 0.000000e+00 : f32
      %17 = vector.broadcast %cst_10 : f32 to vector<16x8xf32>
      %c0_11 = arith.constant 0 : index
      %c0_12 = arith.constant 0 : index
      %18 = vector.load %arg13[%c0_11, %c0_12] : memref<16x8xf32, #tpu.memory_space<vmem>>, vector<16x8xf32>
      tpu.vector_store %arg13[%c0_11, %c0_12], %17 {strides = array<i32>} : memref<16x8xf32, #tpu.memory_space<vmem>>, vector<16x8xf32>,
    } else {
    }
    %c16_i32_2 = arith.constant 16 : i32
    %6 = arith.addi %0, %c16_i32_2 : i32
    %7 = arith.cmpi slt, %2, %6 : i32
    %8 = arith.extui %7 : i1 to i32
    %c0_i32_3 = arith.constant 0 : i32
    %9 = arith.cmpi ne, %8, %c0_i32_3 : i32
    scf.if %9 {
      %c0 = arith.constant 0 : index
      %c0_6 = arith.constant 0 : index
      %c0_7 = arith.constant 0 : index
      %c0_8 = arith.constant 0 : index
      %13 = vector.load %arg4[%c0, %c0_6, %c0_7, %c0_8] : memref<1x1x16x8xf32, #tpu.memory_space<vmem>>, vector<1x1x16x8xf32>
      %14 = vector.shape_cast %13 : vector<1x1x16x8xf32> to vector<16x8xf32>
      %c0_9 = arith.constant 0 : index
      %c0_10 = arith.constant 0 : index
      %c0_11 = arith.constant 0 : index
      %c0_12 = arith.constant 0 : index
      %15 = vector.load %arg5[%c0_9, %c0_10, %c0_11, %c0_12] : memref<1x1x16x8xf32, #tpu.memory_space<vmem>>, vector<1x1x16x8xf32>
      %16 = vector.shape_cast %15 : vector<1x1x16x8xf32> to vector<16x8xf32>
      %c0_13 = arith.constant 0 : index
      %c0_14 = arith.constant 0 : index
      %c0_15 = arith.constant 0 : index
      %c0_16 = arith.constant 0 : index
      %17 = vector.load %arg6[%c0_13, %c0_14, %c0_15, %c0_16] : memref<1x1x16x8xf32, #tpu.memory_space<vmem>>, vector<1x1x16x8xf32>
      %18 = vector.shape_cast %17 : vector<1x1x16x8xf32> to vector<16x8xf32>
      %cst = arith.constant 0.353553385 : f32
      %19 = vector.broadcast %cst : f32 to vector<16x8xf32>
      %20 = arith.mulf %14, %19 : vector<16x8xf32>
      %cst_17 = arith.constant dense<0.000000e+00> : vector<16x16xf32>
      %21 = tpu.matmul %20, %16, %cst_17 {dimension_numbers = #tpu.dot_dimension_numbers<[1], [1], [0], [0], [0, 0, 1, 0], [], []>} : vector<16x8xf32>, vector<16x8xf32>, vector<16x16xf32> -> vector<16x16xf32>
      %22 = tpu.iota {dimensions = array<i32: 0>} : vector<16x16xi32>
      %23 = vector.broadcast %0 : i32 to vector<16x16xi32>
      %24 = arith.addi %23, %22 : vector<16x16xi32>
      %25 = tpu.iota {dimensions = array<i32: 1>} : vector<16x16xi32>
      %26 = vector.broadcast %2 : i32 to vector<16x16xi32>
      %27 = arith.addi %26, %25 : vector<16x16xi32>
      %28 = arith.cmpi sge, %27, %24 : vector<16x16xi32>
      %cst_18 = arith.constant 0.000000e+00 : f32
      %29 = vector.broadcast %cst_18 : f32 to vector<16x16xf32>
      %30 = arith.minimumf %21, %29 : vector<16x16xf32>
      %31 = math.absf %21 : vector<16x16xf32>
      %cst_19 = arith.constant 0.000000e+00 : f32
      %32 = vector.broadcast %cst_19 : f32 to vector<16x16xf32>
      %33 = arith.subf %32, %31 : vector<16x16xf32>
      %34 = math.exp %33 : vector<16x16xf32>
      %35 = math.log1p %34 : vector<16x16xf32>
      %36 = arith.subf %30, %35 : vector<16x16xf32>
      %cst_20 = arith.constant -1.000000e+05 : f32
      %37 = vector.broadcast %cst_20 : f32 to vector<16x16xf32>
      %38 = arith.select %28, %37, %36 : vector<16x16xi1>, vector<16x16xf32>
      %39 = arith.subf %36, %21 : vector<16x16xf32>
      %cst_21 = arith.constant 0.000000e+00 : f32
      %40 = vector.broadcast %cst_21 : f32 to vector<16x16xf32>
      %41 = arith.select %28, %40, %39 : vector<16x16xi1>, vector<16x16xf32>
      %c0_22 = arith.constant 0 : index
      %c0_23 = arith.constant 0 : index
      %42 = vector.load %arg7[%c0_22, %c0_23] : memref<16x16xf32, #tpu.memory_space<vmem>>, vector<16x16xf32>
      %cst_24 = arith.constant dense<0.000000e+00> : vector<16x16xf32>
      %43 = tpu.matmul %41, %42, %cst_24 {dimension_numbers = #tpu.dot_dimension_numbers<[1], [0], [0], [1], [0, 0, 1, 1], [], []>} : vector<16x16xf32>, vector<16x16xf32>, vector<16x16xf32> -> vector<16x16xf32>
      %c0_25 = arith.constant 0 : index
      %c0_26 = arith.constant 0 : index
      %44 = vector.load %arg11[%c0_25, %c0_26] : memref<16x1xf32, #tpu.memory_space<vmem>>, vector<16x1xf32>
      %45 = vector.broadcast %44 : vector<16x1xf32> to vector<16x16xf32>
      %46 = arith.addf %45, %43 : vector<16x16xf32>
      %47 = arith.addf %38, %46 : vector<16x16xf32>
      %48 = math.exp %47 : vector<16x16xf32>
      %c0_27 = arith.constant 0 : index
      %c0_28 = arith.constant 0 : index
      %49 = vector.load %arg13[%c0_27, %c0_28] : memref<16x8xf32, #tpu.memory_space<vmem>>, vector<16x8xf32>
      %cst_29 = arith.constant dense<0.000000e+00> : vector<16x8xf32>
      %50 = tpu.matmul %48, %18, %cst_29 {dimension_numbers = #tpu.dot_dimension_numbers<[1], [0], [0], [1], [0, 0, 1, 1], [], []>} : vector<16x16xf32>, vector<16x8xf32>, vector<16x8xf32> -> vector<16x8xf32>
      %51 = arith.addf %49, %50 : vector<16x8xf32>
      %c0_30 = arith.constant 0 : index
      %c0_31 = arith.constant 0 : index
      %52 = vector.load %arg13[%c0_30, %c0_31] : memref<16x8xf32, #tpu.memory_space<vmem>>, vector<16x8xf32>
      tpu.vector_store %arg13[%c0_30, %c0_31], %51 {strides = array<i32>} : memref<16x8xf32, #tpu.memory_space<vmem>>, vector<16x8xf32>,
      %c0_32 = arith.constant 0 : index
      %c0_33 = arith.constant 0 : index
      %53 = vector.load %arg12[%c0_32, %c0_33] : memref<16x1xf32, #tpu.memory_space<vmem>>, vector<16x1xf32>
      %cst_34 = arith.constant dense<0.000000e+00> : vector<16xf32>
      %54 = vector.multi_reduction <add>, %48, %cst_34 [1] : vector<16x16xf32> to vector<16xf32>
      %55 = vector.shape_cast %54 : vector<16xf32> to vector<16x1xf32>
      %56 = arith.addf %53, %55 : vector<16x1xf32>
      %c0_35 = arith.constant 0 : index
      %c0_36 = arith.constant 0 : index
      %57 = vector.load %arg12[%c0_35, %c0_36] : memref<16x1xf32, #tpu.memory_space<vmem>>, vector<16x1xf32>
      tpu.vector_store %arg12[%c0_35, %c0_36], %56 {strides = array<i32>} : memref<16x1xf32, #tpu.memory_space<vmem>>, vector<16x1xf32>,
      %c0_37 = arith.constant 0 : index
      %c0_38 = arith.constant 0 : index
      %58 = vector.load %arg11[%c0_37, %c0_38] : memref<16x1xf32, #tpu.memory_space<vmem>>, vector<16x1xf32>
      %cst_39 = arith.constant dense<0.000000e+00> : vector<16xf32>
      %59 = vector.multi_reduction <add>, %41, %cst_39 [1] : vector<16x16xf32> to vector<16xf32>
      %60 = vector.shape_cast %59 : vector<16xf32> to vector<16x1xf32>
      %61 = arith.addf %58, %60 : vector<16x1xf32>
      %c0_40 = arith.constant 0 : index
      %c0_41 = arith.constant 0 : index
      %62 = vector.load %arg11[%c0_40, %c0_41] : memref<16x1xf32, #tpu.memory_space<vmem>>, vector<16x1xf32>
      tpu.vector_store %arg11[%c0_40, %c0_41], %61 {strides = array<i32>} : memref<16x1xf32, #tpu.memory_space<vmem>>, vector<16x1xf32>,
    } else {
    }
    %c3_i32_4 = arith.constant 3 : i32
    %10 = arith.cmpi eq, %arg3, %c3_i32_4 : i32
    %11 = arith.extui %10 : i1 to i32
    %c0_i32_5 = arith.constant 0 : i32
    %12 = arith.cmpi ne, %11, %c0_i32_5 : i32
    scf.if %12 {
      %c0 = arith.constant 0 : index
      %c0_6 = arith.constant 0 : index
      %13 = vector.load %arg12[%c0, %c0_6] : memref<16x1xf32, #tpu.memory_space<vmem>>, vector<16x1xf32>
      %cst = arith.constant 1.000000e+00 : f32
      %14 = vector.broadcast %cst : f32 to vector<16x1xf32>
      %15 = arith.subf %14, %13 : vector<16x1xf32>
      %c0_7 = arith.constant 0 : index
      %c0_8 = arith.constant 0 : index
      %16 = vector.load %arg13[%c0_7, %c0_8] : memref<16x8xf32, #tpu.memory_space<vmem>>, vector<16x8xf32>
      %c0_9 = arith.constant 0 : index
      %c0_10 = arith.constant 0 : index
      %c0_11 = arith.constant 0 : index
      %17 = vector.load %arg8[%c0_9, %c0_10, %c0_11] : memref<1x1x8xf32, #tpu.memory_space<vmem>>, vector<1x1x8xf32>
      %18 = vector.shape_cast %17 : vector<1x1x8xf32> to vector<1x8xf32>
      %19 = vector.broadcast %15 : vector<16x1xf32> to vector<16x8xf32>
      %20 = vector.broadcast %18 : vector<1x8xf32> to vector<16x8xf32>
      %21 = arith.mulf %19, %20 : vector<16x8xf32>
      %22 = arith.addf %16, %21 : vector<16x8xf32>
      %23 = arith.mulf %22, %22 : vector<16x8xf32>
      %cst_12 = arith.constant dense<0.000000e+00> : vector<16xf32>
      %24 = vector.multi_reduction <add>, %23, %cst_12 [1] : vector<16x8xf32> to vector<16xf32>
      %25 = vector.shape_cast %24 : vector<16xf32> to vector<16x1xf32>
      %cst_13 = arith.constant 8.000000e+00 : f32
      %26 = vector.broadcast %cst_13 : f32 to vector<16x1xf32>
      %27 = arith.divf %25, %26 : vector<16x1xf32>
      %cst_14 = arith.constant 9.99999997E-7 : f32
      %28 = vector.broadcast %cst_14 : f32 to vector<16x1xf32>
      %29 = arith.addf %27, %28 : vector<16x1xf32>
      %30 = math.rsqrt %29 : vector<16x1xf32>
      %31 = vector.broadcast %30 : vector<16x1xf32> to vector<16x8xf32>
      %32 = arith.mulf %22, %31 : vector<16x8xf32>
      %c0_15 = arith.constant 0 : index
      %c0_16 = arith.constant 0 : index
      %c0_17 = arith.constant 0 : index
      %33 = vector.load %arg9[%c0_15, %c0_16, %c0_17] : memref<1x1x8xf32, #tpu.memory_space<vmem>>, vector<1x1x8xf32>
      %34 = vector.shape_cast %33 : vector<1x1x8xf32> to vector<1x8xf32>
      %35 = vector.broadcast %34 : vector<1x8xf32> to vector<16x8xf32>
      %36 = arith.mulf %32, %35 : vector<16x8xf32>
      %c0_18 = arith.constant 0 : index
      %c0_19 = arith.constant 0 : index
      %c0_20 = arith.constant 0 : index
      %c0_21 = arith.constant 0 : index
      %37 = vector.load %arg10[%c0_18, %c0_19, %c0_20, %c0_21] : memref<1x1x16x8xf32, #tpu.memory_space<vmem>>, vector<1x1x16x8xf32>
      %38 = vector.shape_cast %37 : vector<1x1x16x8xf32> to vector<16x8xf32>
      %39 = vector.shape_cast %36 : vector<16x8xf32> to vector<1x1x16x8xf32>
      tpu.vector_store %arg10[%c0_18, %c0_19, %c0_20, %c0_21], %39 {strides = array<i32>} : memref<1x1x16x8xf32, #tpu.memory_space<vmem>>, vector<1x1x16x8xf32>,
    } else {
    }
    return
  }
  func.func @transform_0(%arg0: i32, %arg1: i32, %arg2: i32, %arg3: i32) -> (i32, i32, i32, i32) {
    %c0_i32 = arith.constant 0 : i32
    %c0_i32_0 = arith.constant 0 : i32
    return %arg0, %arg1, %arg2, %c0_i32 : i32, i32, i32, i32
  }
  func.func @transform_1(%arg0: i32, %arg1: i32, %arg2: i32, %arg3: i32) -> (i32, i32, i32, i32) {
    %c3_i32 = arith.constant 3 : i32
    %0 = arith.subi %c3_i32, %arg3 : i32
    %c0_i32 = arith.constant 0 : i32
    %c0_i32_0 = arith.constant 0 : i32
    return %arg0, %arg1, %0, %c0_i32 : i32, i32, i32, i32
  }
  func.func @transform_2(%arg0: i32, %arg1: i32, %arg2: i32, %arg3: i32) -> (i32, i32, i32, i32) {
    %c3_i32 = arith.constant 3 : i32
    %0 = arith.subi %c3_i32, %arg3 : i32
    %c0_i32 = arith.constant 0 : i32
    %c0_i32_0 = arith.constant 0 : i32
    return %arg0, %arg1, %0, %c0_i32 : i32, i32, i32, i32
  }
  func.func @transform_3(%arg0: i32, %arg1: i32, %arg2: i32, %arg3: i32) -> (i32, i32) {
    %c0_i32 = arith.constant 0 : i32
    %c0_i32_0 = arith.constant 0 : i32
    %c0_i32_1 = arith.constant 0 : i32
    return %c0_i32, %c0_i32_0 : i32, i32
  }
  func.func @transform_4(%arg0: i32, %arg1: i32, %arg2: i32, %arg3: i32) -> (i32, i32, i32) {
    %c0_i32 = arith.constant 0 : i32
    %c0_i32_0 = arith.constant 0 : i32
    %c0_i32_1 = arith.constant 0 : i32
    return %arg1, %c0_i32, %c0_i32_0 : i32, i32, i32
  }
  func.func @transform_5(%arg0: i32, %arg1: i32, %arg2: i32, %arg3: i32) -> (i32, i32, i32) {
    %c0_i32 = arith.constant 0 : i32
    %c0_i32_0 = arith.constant 0 : i32
    %c0_i32_1 = arith.constant 0 : i32
    return %arg1, %c0_i32, %c0_i32_0 : i32, i32, i32
  }
  func.func @transform_6(%arg0: i32, %arg1: i32, %arg2: i32, %arg3: i32) -> (i32, i32, i32, i32) {
    %c0_i32 = arith.constant 0 : i32
    %c0_i32_0 = arith.constant 0 : i32
    return %arg0, %arg1, %arg2, %c0_i32 : i32, i32, i32, i32
  }
}

</mosaic_0001>

<llo_original>
// kernel: tpu_custom_call.1
$region0: #{tpu_custom_call.1}
  #allocation0 [shape = 'u32[]', space=smem, size = 0x4, offset = 0x4, fixed_abs, tag = 'smem constant byte address 0x4 - core index']
  #allocation1 [shape = 'u32[144,128]{1,0:T(1,128)}', space=vmem, size = 0x12000, scoped, tag = 'internal scratch']
  #allocation2 [shape = 'f32[16,1]{1,0:T(8,128)}', space=vmem, size = 0x2000, scoped, tag = 'scratch operand']
  #allocation3 [shape = 'f32[16,1]{1,0:T(8,128)}', space=vmem, size = 0x2000, scoped, tag = 'scratch operand']
  #allocation4 [shape = 'f32[16,8]{1,0:T(8,128)}', space=vmem, size = 0x2000, scoped, tag = 'scratch operand']
  %s0 = inlined_call_operand.vmem [shape: f32[2,4,64,8], index: 0, kind: input, shape index: {}]
  %s1 = inlined_call_operand.vmem [shape: f32[2,4,64,8], index: 1, kind: input, shape index: {}]
  %s2 = inlined_call_operand.vmem [shape: f32[2,4,64,8], index: 2, kind: input, shape index: {}]
  %s3 = inlined_call_operand.vmem [shape: f32[16,16], index: 3, kind: input, shape index: {}]
  %s4 = inlined_call_operand.vmem [shape: f32[4,1,8], index: 4, kind: input, shape index: {}]
  %s5 = inlined_call_operand.vmem [shape: f32[4,1,8], index: 5, kind: input, shape index: {}]
  %s6 = inlined_call_operand.vmem [shape: f32[2,4,64,8], index: 6, kind: output, shape index: {}]
  %s7 = sld [smem:[#allocation0]]
  $region69: #{tpu_custom_call.1} parent=0
    _
  %s9 = ssub.s32 1, %s7
  %s10 = scalar_select 0, %s9, %s7
  loop: start=0, step=1, limit=130
  $region2: #{tpu_custom_call.1} parent=0 // loop_pre_header
    _
  $region3: #{tpu_custom_call.1} parent=0 // loop_header
    %s12 = sphi 0, %s16
    %p13 = scmp.ge.s32.totalorder %s12, 130
    %s19 = sphi 0, %s45
    %s20 = sphi 0, %s41
    %s21 = sphi 0, %s37
    %s22 = sphi 0, %s33
    %s23 = sphi 0, %s19
    %s24 = sphi 0, %s20
    %s25 = sphi 0, %s21
    %s26 = sphi 0, %s22
    %s27 = sphi 0, %s23
    %s28 = sphi 0, %s24
    %s29 = sphi 0, %s25
    %s30 = sphi 0, %s26
    %s52 = sphi 0, %s54
    %s55 = sphi 0, %s52
    %s56 = sphi 0, %s55
    %s72 = sphi 0, %s56
    %s84 = sphi 0, %s86
    %s87 = sphi 0, %s84
    %s88 = sphi 0, %s87
    %s104 = sphi 0, %s88
    %s116 = sphi 0, %s118
    %s119 = sphi 0, %s116
    %s120 = sphi 0, %s119
    %s136 = sphi 0, %s120
    %s140 = sphi 0, %s140
    %s142 = sphi 0, %s140
    %s143 = sphi 0, %s142
    %s157 = sphi 0, %s143
    %s163 = sphi 0, %s165
    %s166 = sphi 0, %s163
    %s167 = sphi 0, %s166
    %s183 = sphi 0, %s167
    %s189 = sphi 0, %s191
    %s192 = sphi 0, %s189
    %s193 = sphi 0, %s192
    %s209 = sphi 0, %s193
    %s219 = sphi 0, %s221
    %s222 = sphi 0, %s219
    %s223 = sphi 0, %s222
    %s239 = sphi 0, %s223
  $region4: #{tpu_custom_call.1} parent=0 // loop_header_branch
    %15 = sbr.rel (%p13) target = $region8
  $region5: #{tpu_custom_call.1} parent=0 // loop_body
    %s17 = ssub.s32 %s12, 1
    %s18 = ssub.s32 %s12, 2
    %s31 = sadd.s32 1, %s22
    %p32 = scmp.ge.s32.totalorder %s31, 4
    %s33 = scalar_select %p32, 0, %s31
    %s34 = sadd.s32 1, %s21
    %s35 = scalar_select %p32, %s34, %s21
    %p36 = scmp.ge.s32.totalorder %s35, 4
    %s37 = scalar_select %p36, 0, %s35
    %s38 = sadd.s32 1, %s20
    %s39 = scalar_select %p36, %s38, %s20
    %p40 = scmp.ge.s32.totalorder %s39, 4
    %s41 = scalar_select %p40, 0, %s39
    %s42 = sadd.s32 1, %s19
    %s43 = scalar_select %p40, %s42, %s19
    %p44 = scmp.ge.s32.totalorder %s43, 2
    %s45 = scalar_select %p44, 0, %s43
    %s46 = ssub.s32 %s19, %s45
    %s47 = ssub.s32 %s20, %s41
    %s48 = sor.u32 %s46, %s47
    %s49 = ssub.s32 %s21, %s37
    %s50 = sor.u32 %s48, %s49
    %p51 = scmp.eq.s32.totalorder %s50, 0
    %s53 = sadd.s32 %s52, 1
    %s54 = scalar_select %p51, %s52, %s53
    %p57 = pneg %p51
    %p58 = scmp.eq.s32.totalorder %s12, 127
    %p59 = por %p57, %p58
    %p60 = scmp.ne.s32.totalorder %s52, %s55
    %p61 = scmp.eq.s32.totalorder %s12, 0
    %p62 = por %p60, %p61
    %p63 = scmp.ne.s32.totalorder %s52, %s55
    %p64 = scmp.eq.s32.totalorder %s17, 127
    %p65 = por %p63, %p64
    %p66 = scmp.ne.s32.totalorder %s55, %s56
    %p67 = scmp.eq.s32.totalorder %s17, 0
    %p68 = por %p66, %p67
    %p69 = scmp.ne.s32.totalorder %s55, %s56
    %p70 = scmp.eq.s32.totalorder %s18, 127
    %p71 = por %p69, %p70
    %p73 = scmp.ne.s32.totalorder %s56, %s72
    %p74 = scmp.eq.s32.totalorder %s18, 0
    %p75 = por %p73, %p74
    %s76 = ssub.s32 3, %s22
    %s77 = ssub.s32 3, %s33
    %s78 = ssub.s32 %s19, %s45
    %s79 = ssub.s32 %s20, %s41
    %s80 = sor.u32 %s78, %s79
    %s81 = ssub.s32 %s76, %s77
    %s82 = sor.u32 %s80, %s81
    %p83 = scmp.eq.s32.totalorder %s82, 0
    %s85 = sadd.s32 %s84, 1
    %s86 = scalar_select %p83, %s84, %s85
    %p89 = pneg %p83
    %p90 = scmp.eq.s32.totalorder %s12, 127
    %p91 = por %p89, %p90
    %p92 = scmp.ne.s32.totalorder %s84, %s87
    %p93 = scmp.eq.s32.totalorder %s12, 0
    %p94 = por %p92, %p93
    %p95 = scmp.ne.s32.totalorder %s84, %s87
    %p96 = scmp.eq.s32.totalorder %s17, 127
    %p97 = por %p95, %p96
    %p98 = scmp.ne.s32.totalorder %s87, %s88
    %p99 = scmp.eq.s32.totalorder %s17, 0
    %p100 = por %p98, %p99
    %p101 = scmp.ne.s32.totalorder %s87, %s88
    %p102 = scmp.eq.s32.totalorder %s18, 127
    %p103 = por %p101, %p102
    %p105 = scmp.ne.s32.totalorder %s88, %s104
    %p106 = scmp.eq.s32.totalorder %s18, 0
    %p107 = por %p105, %p106
    %s108 = ssub.s32 3, %s22
    %s109 = ssub.s32 3, %s33
    %s110 = ssub.s32 %s19, %s45
    %s111 = ssub.s32 %s20, %s41
    %s112 = sor.u32 %s110, %s111
    %s113 = ssub.s32 %s108, %s109
    %s114 = sor.u32 %s112, %s113
    %p115 = scmp.eq.s32.totalorder %s114, 0
    %s117 = sadd.s32 %s116, 1
    %s118 = scalar_select %p115, %s116, %s117
    %p121 = pneg %p115
    %p122 = scmp.eq.s32.totalorder %s12, 127
    %p123 = por %p121, %p122
    %p124 = scmp.ne.s32.totalorder %s116, %s119
    %p125 = scmp.eq.s32.totalorder %s12, 0
    %p126 = por %p124, %p125
    %p127 = scmp.ne.s32.totalorder %s116, %s119
    %p128 = scmp.eq.s32.totalorder %s17, 127
    %p129 = por %p127, %p128
    %p130 = scmp.ne.s32.totalorder %s119, %s120
    %p131 = scmp.eq.s32.totalorder %s17, 0
    %p132 = por %p130, %p131
    %p133 = scmp.ne.s32.totalorder %s119, %s120
    %p134 = scmp.eq.s32.totalorder %s18, 127
    %p135 = por %p133, %p134
    %p137 = scmp.ne.s32.totalorder %s120, %s136
    %p138 = scmp.eq.s32.totalorder %s18, 0
    %p139 = por %p137, %p138
    %s141 = sadd.s32 %s140, 1
    %p144 = scmp.eq.s32.totalorder %s12, 127
    %p145 = scmp.ne.s32.totalorder %s140, %s142
    %p146 = scmp.eq.s32.totalorder %s12, 0
    %p147 = por %p145, %p146
    %p148 = scmp.ne.s32.totalorder %s140, %s142
    %p149 = scmp.eq.s32.totalorder %s17, 127
    %p150 = por %p148, %p149
    %p151 = scmp.ne.s32.totalorder %s142, %s143
    %p152 = scmp.eq.s32.totalorder %s17, 0
    %p153 = por %p151, %p152
    %p154 = scmp.ne.s32.totalorder %s142, %s143
    %p155 = scmp.eq.s32.totalorder %s18, 127
    %p156 = por %p154, %p155
    %p158 = scmp.ne.s32.totalorder %s143, %s157
    %p159 = scmp.eq.s32.totalorder %s18, 0
    %p160 = por %p158, %p159
    %s161 = ssub.s32 %s20, %s41
    %p162 = scmp.eq.s32.totalorder %s161, 0
    %s164 = sadd.s32 %s163, 1
    %s165 = scalar_select %p162, %s163, %s164
    %p168 = pneg %p162
    %p169 = scmp.eq.s32.totalorder %s12, 127
    %p170 = por %p168, %p169
    %p171 = scmp.ne.s32.totalorder %s163, %s166
    %p172 = scmp.eq.s32.totalorder %s12, 0
    %p173 = por %p171, %p172
    %p174 = scmp.ne.s32.totalorder %s163, %s166
    %p175 = scmp.eq.s32.totalorder %s17, 127
    %p176 = por %p174, %p175
    %p177 = scmp.ne.s32.totalorder %s166, %s167
    %p178 = scmp.eq.s32.totalorder %s17, 0
    %p179 = por %p177, %p178
    %p180 = scmp.ne.s32.totalorder %s166, %s167
    %p181 = scmp.eq.s32.totalorder %s18, 127
    %p182 = por %p180, %p181
    %p184 = scmp.ne.s32.totalorder %s167, %s183
    %p185 = scmp.eq.s32.totalorder %s18, 0
    %p186 = por %p184, %p185
    %s187 = ssub.s32 %s20, %s41
    %p188 = scmp.eq.s32.totalorder %s187, 0
    %s190 = sadd.s32 %s189, 1
    %s191 = scalar_select %p188, %s189, %s190
    %p194 = pneg %p188
    %p195 = scmp.eq.s32.totalorder %s12, 127
    %p196 = por %p194, %p195
    %p197 = scmp.ne.s32.totalorder %s189, %s192
    %p198 = scmp.eq.s32.totalorder %s12, 0
    %p199 = por %p197, %p198
    %p200 = scmp.ne.s32.totalorder %s189, %s192
    %p201 = scmp.eq.s32.totalorder %s17, 127
    %p202 = por %p200, %p201
    %p203 = scmp.ne.s32.totalorder %s192, %s193
    %p204 = scmp.eq.s32.totalorder %s17, 0
    %p205 = por %p203, %p204
    %p206 = scmp.ne.s32.totalorder %s192, %s193
    %p207 = scmp.eq.s32.totalorder %s18, 127
    %p208 = por %p206, %p207
    %p210 = scmp.ne.s32.totalorder %s193, %s209
    %p211 = scmp.eq.s32.totalorder %s18, 0
    %p212 = por %p210, %p211
    %s213 = ssub.s32 %s19, %s45
    %s214 = ssub.s32 %s20, %s41
    %s215 = sor.u32 %s213, %s214
    %s216 = ssub.s32 %s21, %s37
    %s217 = sor.u32 %s215, %s216
    %p218 = scmp.eq.s32.totalorder %s217, 0
    %s220 = sadd.s32 %s219, 1
    %s221 = scalar_select %p218, %s219, %s220
    %p224 = pneg %p218
    %p225 = scmp.eq.s32.totalorder %s12, 127
    %p226 = por %p224, %p225
    %p227 = scmp.ne.s32.totalorder %s219, %s222
    %p228 = scmp.eq.s32.totalorder %s12, 0
    %p229 = por %p227, %p228
    %p230 = scmp.ne.s32.totalorder %s219, %s222
    %p231 = scmp.eq.s32.totalorder %s17, 127
    %p232 = por %p230, %p231
    %p233 = scmp.ne.s32.totalorder %s222, %s223
    %p234 = scmp.eq.s32.totalorder %s17, 0
    %p235 = por %p233, %p234
    %p236 = scmp.ne.s32.totalorder %s222, %s223
    %p237 = scmp.eq.s32.totalorder %s18, 127
    %p238 = por %p236, %p237
    %p240 = scmp.ne.s32.totalorder %s223, %s239
    %p241 = scmp.eq.s32.totalorder %s18, 0
    %p242 = por %p240, %p241
    %p243 = scmp.le.s32.totalorder 1, %s12
    %p244 = scmp.lt.s32.totalorder %s12, 129
    %p245 = pnand %p243, %p244
    %p246 = pneg %p245
    // Predicated region
    $region9: #{tpu_custom_call.1} parent=5 // pred_check
      _
    $region10: #{tpu_custom_call.1} parent=5 // pred_check_branch
      %248 = sbr.rel (%p245) target = $region12
    $region11: #{tpu_custom_call.1} parent=5 // pred_region
      %s249 = ssub.s32 %s12, 1
      // Predicated region
      $region13: #{tpu_custom_call.1} parent=11 // pred_check
        %p250 = pneg %p153
      $region14: #{tpu_custom_call.1} parent=11 // pred_check_branch
        %252 = sbr.rel (%p250) target = $region16
      $region15: #{tpu_custom_call.1} parent=11 // pred_region
        _
      $region16: #{tpu_custom_call.1} parent=11 // pred_fallthru
        _
    $region12: #{tpu_custom_call.1} parent=5 // pred_fallthru
      _
    %p253 = scmp.lt.s32.totalorder %s12, 128
    // Predicated region
    $region17: #{tpu_custom_call.1} parent=5 // pred_check
      %p254 = pneg %p253
    $region18: #{tpu_custom_call.1} parent=5 // pred_check_branch
      %256 = sbr.rel (%p254) target = $region20
    $region19: #{tpu_custom_call.1} parent=5 // pred_region
      // Predicated region
      $region21: #{tpu_custom_call.1} parent=19 // pred_check
        %p257 = pneg %p62
      $region22: #{tpu_custom_call.1} parent=19 // pred_check_branch
        %259 = sbr.rel (%p257) target = $region24
      $region23: #{tpu_custom_call.1} parent=19 // pred_region
        %s260 = smul.u32 2, %s21
        %p261 = scmp.lt.s32.totalorder %s19, 1
        %s262 = scalar_select %p261, %s19, 1
        %p263 = scmp.lt.s32.totalorder %s20, 3
        %s264 = scalar_select %p263, %s20, 3
        %p265 = scmp.lt.s32.totalorder %s260, 7
        %s266 = scalar_select %p265, %s260, 7
        %s267 = smul.addr %s264, 8
        %s268 = sadd.s32 %s266, %s267
        %s269 = smul.addr %s262, 32
        %s270 = sadd.s32 %s268, %s269
        %s271 = smul.addr %s270, 8
        %s272 = scalar_lea.vmem %s0, %s271
        %s273 = smul.u32 2, %s21
      $region24: #{tpu_custom_call.1} parent=19 // pred_fallthru
        _
      // Predicated region
      $region25: #{tpu_custom_call.1} parent=19 // pred_check
        %p274 = pneg %p94
      $region26: #{tpu_custom_call.1} parent=19 // pred_check_branch
        %276 = sbr.rel (%p274) target = $region28
      $region27: #{tpu_custom_call.1} parent=19 // pred_region
        %s277 = ssub.s32 3, %s22
        %s278 = smul.u32 2, %s277
        %p279 = scmp.lt.s32.totalorder %s19, 1
        %s280 = scalar_select %p279, %s19, 1
        %p281 = scmp.lt.s32.totalorder %s20, 3
        %s282 = scalar_select %p281, %s20, 3
        %p283 = scmp.lt.s32.totalorder %s278, 7
        %s284 = scalar_select %p283, %s278, 7
        %s285 = smul.addr %s282, 8
        %s286 = sadd.s32 %s284, %s285
        %s287 = smul.addr %s280, 32
        %s288 = sadd.s32 %s286, %s287
        %s289 = smul.addr %s288, 8
        %s290 = scalar_lea.vmem %s1, %s289
        %s291 = ssub.s32 3, %s22
        %s292 = smul.u32 2, %s291
      $region28: #{tpu_custom_call.1} parent=19 // pred_fallthru
        _
      // Predicated region
      $region29: #{tpu_custom_call.1} parent=19 // pred_check
        %p293 = pneg %p126
      $region30: #{tpu_custom_call.1} parent=19 // pred_check_branch
        %295 = sbr.rel (%p293) target = $region32
      $region31: #{tpu_custom_call.1} parent=19 // pred_region
        %s296 = ssub.s32 3, %s22
        %s297 = smul.u32 2, %s296
        %p298 = scmp.lt.s32.totalorder %s19, 1
        %s299 = scalar_select %p298, %s19, 1
        %p300 = scmp.lt.s32.totalorder %s20, 3
        %s301 = scalar_select %p300, %s20, 3
        %p302 = scmp.lt.s32.totalorder %s297, 7
        %s303 = scalar_select %p302, %s297, 7
        %s304 = smul.addr %s301, 8
        %s305 = sadd.s32 %s303, %s304
        %s306 = smul.addr %s299, 32
        %s307 = sadd.s32 %s305, %s306
        %s308 = smul.addr %s307, 8
        %s309 = scalar_lea.vmem %s2, %s308
        %s310 = ssub.s32 3, %s22
        %s311 = smul.u32 2, %s310
      $region32: #{tpu_custom_call.1} parent=19 // pred_fallthru
        _
      // Predicated region
      $region33: #{tpu_custom_call.1} parent=19 // pred_check
        %p312 = pneg %p173
      $region34: #{tpu_custom_call.1} parent=19 // pred_check_branch
        %314 = sbr.rel (%p312) target = $region36
      $region35: #{tpu_custom_call.1} parent=19 // pred_region
        %p315 = scmp.lt.s32.totalorder %s20, 3
        %s316 = scalar_select %p315, %s20, 3
        %s317 = scalar_lea.vmem %s4, %s316
      $region36: #{tpu_custom_call.1} parent=19 // pred_fallthru
        _
      // Predicated region
      $region37: #{tpu_custom_call.1} parent=19 // pred_check
        %p318 = pneg %p199
      $region38: #{tpu_custom_call.1} parent=19 // pred_check_branch
        %320 = sbr.rel (%p318) target = $region40
      $region39: #{tpu_custom_call.1} parent=19 // pred_region
        %p321 = scmp.lt.s32.totalorder %s20, 3
        %s322 = scalar_select %p321, %s20, 3
        %s323 = scalar_lea.vmem %s5, %s322
      $region40: #{tpu_custom_call.1} parent=19 // pred_fallthru
        _
    $region20: #{tpu_custom_call.1} parent=5 // pred_fallthru
      _
    %p324 = scmp.le.s32.totalorder 1, %s12
    %p325 = scmp.lt.s32.totalorder %s12, 129
    %p326 = pnand %p324, %p325
    %p327 = pneg %p326
    // Predicated region
    $region41: #{tpu_custom_call.1} parent=5 // pred_check
      _
    $region42: #{tpu_custom_call.1} parent=5 // pred_check_branch
      %329 = sbr.rel (%p326) target = $region44
    $region43: #{tpu_custom_call.1} parent=5 // pred_region
      %s330 = ssub.s32 %s12, 1
      %s331 = smul.u32 2, %s25
      %p332 = scmp.lt.s32.totalorder %s23, 1
      %s333 = scalar_select %p332, %s23, 1
      %p334 = scmp.lt.s32.totalorder %s24, 3
      %s335 = scalar_select %p334, %s24, 3
      %p336 = scmp.lt.s32.totalorder %s331, 7
      %s337 = scalar_select %p336, %s331, 7
      %s338 = smul.addr %s335, 8
      %s339 = sadd.s32 %s337, %s338
      %s340 = smul.addr %s333, 32
      %s341 = sadd.s32 %s339, %s340
      %s342 = smul.addr %s341, 8
      %s343 = scalar_lea.vmem %s0, %s342
      %p344 = pneg %p68
      %p345 = pneg %p65
      %s346 = ssub.s32 3, %s26
      %s347 = smul.u32 2, %s346
      %p348 = scmp.lt.s32.totalorder %s23, 1
      %s349 = scalar_select %p348, %s23, 1
      %p350 = scmp.lt.s32.totalorder %s24, 3
      %s351 = scalar_select %p350, %s24, 3
      %p352 = scmp.lt.s32.totalorder %s347, 7
      %s353 = scalar_select %p352, %s347, 7
      %s354 = smul.addr %s351, 8
      %s355 = sadd.s32 %s353, %s354
      %s356 = smul.addr %s349, 32
      %s357 = sadd.s32 %s355, %s356
      %s358 = smul.addr %s357, 8
      %s359 = scalar_lea.vmem %s1, %s358
      %p360 = pneg %p100
      %p361 = pneg %p97
      %s362 = ssub.s32 3, %s26
      %s363 = smul.u32 2, %s362
      %p364 = scmp.lt.s32.totalorder %s23, 1
      %s365 = scalar_select %p364, %s23, 1
      %p366 = scmp.lt.s32.totalorder %s24, 3
      %s367 = scalar_select %p366, %s24, 3
      %p368 = scmp.lt.s32.totalorder %s363, 7
      %s369 = scalar_select %p368, %s363, 7
      %s370 = smul.addr %s367, 8
      %s371 = sadd.s32 %s369, %s370
      %s372 = smul.addr %s365, 32
      %s373 = sadd.s32 %s371, %s372
      %s374 = smul.addr %s373, 8
      %s375 = scalar_lea.vmem %s2, %s374
      %p376 = pneg %p132
      %p377 = pneg %p129
      %p378 = pneg %p153
      %p379 = pneg %p150
      %p380 = scmp.lt.s32.totalorder %s24, 3
      %s381 = scalar_select %p380, %s24, 3
      %s382 = scalar_lea.vmem %s4, %s381
      %p383 = pneg %p179
      %p384 = pneg %p176
      %p385 = scmp.lt.s32.totalorder %s24, 3
      %s386 = scalar_select %p385, %s24, 3
      %s387 = scalar_lea.vmem %s5, %s386
      %p388 = pneg %p205
      %p389 = pneg %p202
      %p390 = pneg %p235
      %p391 = pneg %p232
      %s392 = smul.u32 2, %s25
      %p393 = scmp.lt.s32.totalorder %s23, 1
      %s394 = scalar_select %p393, %s23, 1
      %p395 = scmp.lt.s32.totalorder %s24, 3
      %s396 = scalar_select %p395, %s24, 3
      %p397 = scmp.lt.s32.totalorder %s392, 7
      %s398 = scalar_select %p397, %s392, 7
      %s399 = smul.addr %s396, 8
      %s400 = sadd.s32 %s398, %s399
      %s401 = smul.addr %s394, 32
      %s402 = sadd.s32 %s400, %s401
      %s403 = smul.addr %s402, 8
      %s404 = scalar_lea.vmem %s6, %s403
      %s405 = smul.u32 2, %s25
      %p406 = scmp.lt.s32.totalorder %s23, 1
      %s407 = scalar_select %p406, %s23, 1
      %p408 = scmp.lt.s32.totalorder %s24, 3
      %s409 = scalar_select %p408, %s24, 3
      %p410 = scmp.lt.s32.totalorder %s405, 7
      %s411 = scalar_select %p410, %s405, 7
      %s412 = smul.addr %s409, 8
      %s413 = sadd.s32 %s411, %s412
      %s414 = smul.addr %s407, 32
      %s415 = sadd.s32 %s413, %s414
      %s416 = smul.addr %s415, 8
      %s417 = scalar_lea.vmem %s0, %s416
      %s418 = smul.u32 2, %s25
      %s419 = ssub.s32 3, %s26
      %s420 = smul.u32 2, %s419
      %p421 = scmp.lt.s32.totalorder %s23, 1
      %s422 = scalar_select %p421, %s23, 1
      %p423 = scmp.lt.s32.totalorder %s24, 3
      %s424 = scalar_select %p423, %s24, 3
      %p425 = scmp.lt.s32.totalorder %s420, 7
      %s426 = scalar_select %p425, %s420, 7
      %s427 = smul.addr %s424, 8
      %s428 = sadd.s32 %s426, %s427
      %s429 = smul.addr %s422, 32
      %s430 = sadd.s32 %s428, %s429
      %s431 = smul.addr %s430, 8
      %s432 = scalar_lea.vmem %s1, %s431
      %s433 = ssub.s32 3, %s26
      %s434 = smul.u32 2, %s433
      %s435 = ssub.s32 3, %s26
      %s436 = smul.u32 2, %s435
      %p437 = scmp.lt.s32.totalorder %s23, 1
      %s438 = scalar_select %p437, %s23, 1
      %p439 = scmp.lt.s32.totalorder %s24, 3
      %s440 = scalar_select %p439, %s24, 3
      %p441 = scmp.lt.s32.totalorder %s436, 7
      %s442 = scalar_select %p441, %s436, 7
      %s443 = smul.addr %s440, 8
      %s444 = sadd.s32 %s442, %s443
      %s445 = smul.addr %s438, 32
      %s446 = sadd.s32 %s444, %s445
      %s447 = smul.addr %s446, 8
      %s448 = scalar_lea.vmem %s2, %s447
      %s449 = ssub.s32 3, %s26
      %s450 = smul.u32 2, %s449
      %p451 = scmp.lt.s32.totalorder %s24, 3
      %s452 = scalar_select %p451, %s24, 3
      %s453 = scalar_lea.vmem %s4, %s452
      %p454 = scmp.lt.s32.totalorder %s24, 3
      %s455 = scalar_select %p454, %s24, 3
      %s456 = scalar_lea.vmem %s5, %s455
      %s457 = smul.u32 2, %s25
      %p458 = scmp.lt.s32.totalorder %s23, 1
      %s459 = scalar_select %p458, %s23, 1
      %p460 = scmp.lt.s32.totalorder %s24, 3
      %s461 = scalar_select %p460, %s24, 3
      %p462 = scmp.lt.s32.totalorder %s457, 7
      %s463 = scalar_select %p462, %s457, 7
      %s464 = smul.addr %s461, 8
      %s465 = sadd.s32 %s463, %s464
      %s466 = smul.addr %s459, 32
      %s467 = sadd.s32 %s465, %s466
      %s468 = smul.addr %s467, 8
      %s469 = scalar_lea.vmem %s6, %s468
      %s470 = smul.u32 2, %s25
      %s471 = smul.u32 %s25, 16
      %s472 = ssub.s32 3, %s26
      %s473 = smul.u32 %s472, 16
      %p474 = scmp.eq.s32.totalorder %s26, 0
      // Predicated region
      $region45: #{tpu_custom_call.1} parent=43 // pred_check
        %p475 = pneg %p474
      $region46: #{tpu_custom_call.1} parent=43 // pred_check_branch
        %477 = sbr.rel (%p475) target = $region48
      $region47: #{tpu_custom_call.1} parent=43 // pred_region
        %vm478 = vcmask 7168
        %479 = vst.msk [vmem:[#allocation2] sm:$0xff] %vm478, 0.0
        %480 = vst.msk [vmem:[#allocation2 + $0x8] sm:$0xff] %vm478, 0.0
        %481 = vst.msk [vmem:[#allocation3] sm:$0xff] %vm478, 0.0
        %482 = vst.msk [vmem:[#allocation3 + $0x8] sm:$0xff] %vm478, 0.0
        %vm483 = vcmask 64512
        %484 = vst.msk [vmem:[#allocation4] sm:$0xff] %vm483, 0.0
        %485 = vst.msk [vmem:[#allocation4 + $0x8] sm:$0xff] %vm483, 0.0
      $region48: #{tpu_custom_call.1} parent=43 // pred_fallthru
        _
      %s486 = sadd.s32 %s471, 16
      %p487 = scmp.lt.s32.totalorder %s473, %s486
      // Predicated region
      $region49: #{tpu_custom_call.1} parent=43 // pred_check
        %p488 = pneg %p487
      $region50: #{tpu_custom_call.1} parent=43 // pred_check_branch
        %490 = sbr.rel (%p488) target = $region52
      $region51: #{tpu_custom_call.1} parent=43 // pred_region
        %v491 = vld [vmem:[%s417] sm:$0xff]
        %v492 = vld [vmem:[%s417 + $0x8] sm:$0xff]
        %v493 = vld [vmem:[%s432] sm:$0xff]
        %v494 = vld [vmem:[%s432 + $0x8] sm:$0xff]
        %v495 = vld [vmem:[%s448] sm:$0xff]
        %v496 = vld [vmem:[%s448 + $0x8] sm:$0xff]
        %v497 = vmul.f32 %v491, 0.35355338
        %v498 = vmul.f32 %v492, 0.35355338
        %vm499 = vcmask 64512
        %v501 = vsel %vm499, %v497, 0
        %v504 = vsel %vm499, %v498, 0
        %v507 = vsel %vm499, %v493, 0
        %v510 = vsel %vm499, %v494, 0
        %512 = vmatprep.subr.mxu0 0.0
        %513 = vmatpush1.xpose.msra.mxu0 %v507
        %514 = vmatprep.subr.mxu0 0.0
        %515 = vmatpush1.xpose.msra.mxu0 %v510
        %516 = vmatprep.subr.mxu0 0.0
        %517 = vmatpush1.xpose.msra.mxu0 0.0
        %518 = vmatprep.subr.mxu0 0.0
        %519 = vmatpush1.xpose.msra.mxu0 0.0
        %520 = vmatprep.subr.mxu0 0.0
        %521 = vmatpush1.xpose.msra.mxu0 0.0
        %522 = vmatprep.subr.mxu0 0.0
        %523 = vmatpush1.xpose.msra.mxu0 0.0
        %524 = vmatprep.subr.mxu0 0.0
        %525 = vmatpush1.xpose.msra.mxu0 0.0
        %526 = vmatprep.subr.mxu0 0.0
        %527 = vmatpush1.xpose.msra.mxu0 0.0
        %528 = vmatprep.subr.mxu0 0.0
        %529 = vmatpush1.xpose.msra.mxu0 0.0
        %530 = vmatprep.subr.mxu0 0.0
        %531 = vmatpush1.xpose.msra.mxu0 0.0
        %532 = vmatprep.subr.mxu0 0.0
        %533 = vmatpush1.xpose.msra.mxu0 0.0
        %534 = vmatprep.subr.mxu0 0.0
        %535 = vmatpush1.xpose.msra.mxu0 0.0
        %536 = vmatprep.subr.mxu0 0.0
        %537 = vmatpush1.xpose.msra.mxu0 0.0
        %538 = vmatprep.subr.mxu0 0.0
        %539 = vmatpush1.xpose.msra.mxu0 0.0
        %540 = vmatprep.subr.mxu0 0.0
        %541 = vmatpush1.xpose.msra.mxu0 0.0
        %542 = vmatprep.subr.mxu0 0.0
        %543 = vmatpush1.xpose.msra.mxu0 0.0
        %544 = vmatprep.subr.mxu0 0.0
        %545 = vmatpush1.xpose.msra.mxu0 0.0
        %546 = vmatprep.subr.mxu0 0.0
        %547 = vmatpush1.xpose.msra.mxu0 0.0
        %548 = vmatprep.subr.mxu0 0.0
        %549 = vmatpush1.xpose.msra.mxu0 0.0
        %550 = vmatprep.subr.mxu0 0.0
        %551 = vmatpush1.xpose.msra.mxu0 0.0
        %552 = vmatprep.subr.mxu0 0.0
        %553 = vmatpush1.xpose.msra.mxu0 0.0
        %554 = vmatprep.subr.mxu0 0.0
        %555 = vmatpush1.xpose.msra.mxu0 0.0
        %556 = vmatprep.subr.mxu0 0.0
        %557 = vmatpush1.xpose.msra.mxu0 0.0
        %558 = vmatprep.subr.mxu0 0.0
        %559 = vmatpush1.xpose.msra.mxu0 0.0
        %560 = vmatprep.subr.mxu0 0.0
        %561 = vmatpush1.xpose.msra.mxu0 0.0
        %562 = vmatprep.subr.mxu0 0.0
        %563 = vmatpush1.xpose.msra.mxu0 0.0
        %564 = vmatprep.subr.mxu0 0.0
        %565 = vmatpush1.xpose.msra.mxu0 0.0
        %566 = vmatprep.subr.mxu0 0.0
        %567 = vmatpush1.xpose.msra.mxu0 0.0
        %568 = vmatprep.subr.mxu0 0.0
        %569 = vmatpush1.xpose.msra.mxu0 0.0
        %570 = vmatprep.subr.mxu0 0.0
        %571 = vmatpush1.xpose.msra.mxu0 0.0
        %572 = vmatprep.subr.mxu0 0.0
        %573 = vmatpush1.xpose.msra.mxu0 0.0
        %574 = vmatprep.subr.mxu0 0.0
        %575 = vmatpush1.xpose.msra.mxu0 0.0
        %576 = vmatprep.mubr.f32.mxu0 0.0
        %577 = vmatmul.mubr.f32.gmra.mrb[0].mxu0 %v501
        %v578 = vpop.f32.mrb[0].mxu0
        %v579 = vadd.f32 0.0, %v578
        %v580 = vpop.f32.mrb[0].mxu0
        %581 = vmatprep.mubr.f32.mxu0 0.0
        %582 = vmatmul.mubr.f32.gmra.mrb[0].mxu0 %v504
        %v583 = vpop.f32.mrb[0].mxu0
        %v584 = vadd.f32 0.0, %v583
        %v585 = vpop.f32.mrb[0].mxu0
        %586 = vdwg.mxu0
        %v587 = vlaneseq
        %v588 = vshrl.u32 %v587, 7
        %v589 = vadd.s32 %v588, 8
        %v590 = vstv %s471
        %v591 = vadd.s32 %v590, %v588
        %v592 = vadd.s32 %v590, %v589
        %v593 = vlaneseq
        %v594 = vand.u32 %v593, 127
        %v595 = vstv %s473
        %v596 = vadd.s32 %v595, %v594
        %vm597 = vcmp.ge.s32.totalorder %v596, %v591
        %vm598 = vcmp.ge.s32.totalorder %v596, %v592
        %v599 = vmin.f32 %v579, 0.0
        %v600 = vmin.f32 %v584, 0.0
        %v601 = vand.u32 2147483647, %v579
        %v602 = vand.u32 2147483647, %v584
        %v603 = vsub.f32 0.0, %v601
        %v604 = vsub.f32 0.0, %v602
        %v605 = vmul.f32 %v603, 1.442695
        %v606 = vpow.pop %v605
        %v607 = vmul.f32 %v604, 1.442695
        %v608 = vpow.pop %v607
        %v609 = vadd.f32 %v606, 1.0
        %v610 = vlog2.pop %v609
        %v611 = vmul.f32 %v610, 0.6931472
        %v612 = vmul.f32 -0.5, %v606
        %v613 = vadd.f32 %v612, 1.0
        %v614 = vmul.f32 %v613, %v606
        %v615 = vand.u32 2147483647, %v606
        %vm616 = vcmp.lt.f32.partialorder %v615, 0.0004427343
        %v617 = vsel %vm616, %v614, %v611
        %v618 = vadd.f32 %v608, 1.0
        %v619 = vlog2.pop %v618
        %v620 = vmul.f32 %v619, 0.6931472
        %v621 = vmul.f32 -0.5, %v608
        %v622 = vadd.f32 %v621, 1.0
        %v623 = vmul.f32 %v622, %v608
        %v624 = vand.u32 2147483647, %v608
        %vm625 = vcmp.lt.f32.partialorder %v624, 0.0004427343
        %v626 = vsel %vm625, %v623, %v620
        %v627 = vsub.f32 %v599, %v617
        %v628 = vsub.f32 %v600, %v626
        %v629 = vsel %vm597, -100000.0, %v627
        %v630 = vsel %vm598, -100000.0, %v628
        %v631 = vsub.f32 %v627, %v579
        %v632 = vsub.f32 %v628, %v584
        %v633 = vsel %vm597, 0.0, %v631
        %v634 = vsel %vm598, 0.0, %v632
        %v635 = vld [vmem:[%s3] sm:$0xff]
        %v636 = vld [vmem:[%s3 + $0x8] sm:$0xff]
        %vm637 = vcmask 130048
        %v639 = vsel %vm637, %v633, 0
        %v642 = vsel %vm637, %v634, 0
        %644 = vmatprep.subr.mxu0 0.0
        %645 = vmatpush1.msra.mxu0 %v635
        %646 = vmatprep.subr.mxu0 0.0
        %647 = vmatpush1.msra.mxu0 %v636
        %648 = vmatprep.subr.mxu0 0.0
        %649 = vmatpush1.msra.mxu0 0.0
        %650 = vmatprep.subr.mxu0 0.0
        %651 = vmatpush1.msra.mxu0 0.0
        %652 = vmatprep.subr.mxu0 0.0
        %653 = vmatpush1.msra.mxu0 0.0
        %654 = vmatprep.subr.mxu0 0.0
        %655 = vmatpush1.msra.mxu0 0.0
        %656 = vmatprep.subr.mxu0 0.0
        %657 = vmatpush1.msra.mxu0 0.0
        %658 = vmatprep.subr.mxu0 0.0
        %659 = vmatpush1.msra.mxu0 0.0
        %660 = vmatprep.subr.mxu0 0.0
        %661 = vmatpush1.msra.mxu0 0.0
        %662 = vmatprep.subr.mxu0 0.0
        %663 = vmatpush1.msra.mxu0 0.0
        %664 = vmatprep.subr.mxu0 0.0
        %665 = vmatpush1.msra.mxu0 0.0
        %666 = vmatprep.subr.mxu0 0.0
        %667 = vmatpush1.msra.mxu0 0.0
        %668 = vmatprep.subr.mxu0 0.0
        %669 = vmatpush1.msra.mxu0 0.0
        %670 = vmatprep.subr.mxu0 0.0
        %671 = vmatpush1.msra.mxu0 0.0
        %672 = vmatprep.subr.mxu0 0.0
        %673 = vmatpush1.msra.mxu0 0.0
        %674 = vmatprep.subr.mxu0 0.0
        %675 = vmatpush1.msra.mxu0 0.0
        %676 = vmatprep.subr.mxu0 0.0
        %677 = vmatpush1.msra.mxu0 0.0
        %678 = vmatprep.subr.mxu0 0.0
        %679 = vmatpush1.msra.mxu0 0.0
        %680 = vmatprep.subr.mxu0 0.0
        %681 = vmatpush1.msra.mxu0 0.0
        %682 = vmatprep.subr.mxu0 0.0
        %683 = vmatpush1.msra.mxu0 0.0
        %684 = vmatprep.subr.mxu0 0.0
        %685 = vmatpush1.msra.mxu0 0.0
        %686 = vmatprep.subr.mxu0 0.0
        %687 = vmatpush1.msra.mxu0 0.0
        %688 = vmatprep.subr.mxu0 0.0
        %689 = vmatpush1.msra.mxu0 0.0
        %690 = vmatprep.subr.mxu0 0.0
        %691 = vmatpush1.msra.mxu0 0.0
        %692 = vmatprep.subr.mxu0 0.0
        %693 = vmatpush1.msra.mxu0 0.0
        %694 = vmatprep.subr.mxu0 0.0
        %695 = vmatpush1.msra.mxu0 0.0
        %696 = vmatprep.subr.mxu0 0.0
        %697 = vmatpush1.msra.mxu0 0.0
        %698 = vmatprep.subr.mxu0 0.0
        %699 = vmatpush1.msra.mxu0 0.0
        %700 = vmatprep.subr.mxu0 0.0
        %701 = vmatpush1.msra.mxu0 0.0
        %702 = vmatprep.subr.mxu0 0.0
        %703 = vmatpush1.msra.mxu0 0.0
        %704 = vmatprep.subr.mxu0 0.0
        %705 = vmatpush1.msra.mxu0 0.0
        %706 = vmatprep.subr.mxu0 0.0
        %707 = vmatpush1.msra.mxu0 0.0
        %708 = vmatprep.mubr.f32.mxu0 0.0
        %709 = vmatmul.mubr.f32.gmra.mrb[0].mxu0 %v639
        %v710 = vpop.f32.mrb[0].mxu0
        %v711 = vadd.f32 0.0, %v710
        %v712 = vpop.f32.mrb[0].mxu0
        %713 = vmatprep.mubr.f32.mxu0 0.0
        %714 = vmatmul.mubr.f32.gmra.mrb[0].mxu0 %v642
        %v715 = vpop.f32.mrb[0].mxu0
        %v716 = vadd.f32 0.0, %v715
        %v717 = vpop.f32.mrb[0].mxu0
        %718 = vdwg.mxu0
        %v719 = vld [vmem:[#allocation2] sm:$0xff]
        %v720 = vld [vmem:[#allocation2 + $0x8] sm:$0xff]
        %722 = vset.pattern.permute.xlu0 0
        %723 = vperm.xlu0 %722, %v719
        %v724 = vpop.permute.xlu0 %723
        %727 = vset.pattern.permute.xlu0 0
        %728 = vperm.xlu0 %727, %v720
        %v729 = vpop.permute.xlu0 %728
        %v731 = vadd.f32 %v724, %v711
        %v732 = vadd.f32 %v729, %v716
        %v733 = vadd.f32 %v629, %v731
        %v734 = vadd.f32 %v630, %v732
        %v735 = vmul.f32 %v733, 1.442695
        %v736 = vpow.pop %v735
        %v737 = vmul.f32 %v734, 1.442695
        %v738 = vpow.pop %v737
        %v739 = vld [vmem:[#allocation4] sm:$0xff]
        %v740 = vld [vmem:[#allocation4 + $0x8] sm:$0xff]
        %v742 = vsel %vm637, %v736, 0
        %v745 = vsel %vm637, %v738, 0
        %747 = vmatprep.subr.mxu0 0.0
        %748 = vmatpush1.msra.mxu0 %v495
        %749 = vmatprep.subr.mxu0 0.0
        %750 = vmatpush1.msra.mxu0 %v496
        %751 = vmatprep.subr.mxu0 0.0
        %752 = vmatpush1.msra.mxu0 0.0
        %753 = vmatprep.subr.mxu0 0.0
        %754 = vmatpush1.msra.mxu0 0.0
        %755 = vmatprep.subr.mxu0 0.0
        %756 = vmatpush1.msra.mxu0 0.0
        %757 = vmatprep.subr.mxu0 0.0
        %758 = vmatpush1.msra.mxu0 0.0
        %759 = vmatprep.subr.mxu0 0.0
        %760 = vmatpush1.msra.mxu0 0.0
        %761 = vmatprep.subr.mxu0 0.0
        %762 = vmatpush1.msra.mxu0 0.0
        %763 = vmatprep.subr.mxu0 0.0
        %764 = vmatpush1.msra.mxu0 0.0
        %765 = vmatprep.subr.mxu0 0.0
        %766 = vmatpush1.msra.mxu0 0.0
        %767 = vmatprep.subr.mxu0 0.0
        %768 = vmatpush1.msra.mxu0 0.0
        %769 = vmatprep.subr.mxu0 0.0
        %770 = vmatpush1.msra.mxu0 0.0
        %771 = vmatprep.subr.mxu0 0.0
        %772 = vmatpush1.msra.mxu0 0.0
        %773 = vmatprep.subr.mxu0 0.0
        %774 = vmatpush1.msra.mxu0 0.0
        %775 = vmatprep.subr.mxu0 0.0
        %776 = vmatpush1.msra.mxu0 0.0
        %777 = vmatprep.subr.mxu0 0.0
        %778 = vmatpush1.msra.mxu0 0.0
        %779 = vmatprep.subr.mxu0 0.0
        %780 = vmatpush1.msra.mxu0 0.0
        %781 = vmatprep.subr.mxu0 0.0
        %782 = vmatpush1.msra.mxu0 0.0
        %783 = vmatprep.subr.mxu0 0.0
        %784 = vmatpush1.msra.mxu0 0.0
        %785 = vmatprep.subr.mxu0 0.0
        %786 = vmatpush1.msra.mxu0 0.0
        %787 = vmatprep.subr.mxu0 0.0
        %788 = vmatpush1.msra.mxu0 0.0
        %789 = vmatprep.subr.mxu0 0.0
        %790 = vmatpush1.msra.mxu0 0.0
        %791 = vmatprep.subr.mxu0 0.0
        %792 = vmatpush1.msra.mxu0 0.0
        %793 = vmatprep.subr.mxu0 0.0
        %794 = vmatpush1.msra.mxu0 0.0
        %795 = vmatprep.subr.mxu0 0.0
        %796 = vmatpush1.msra.mxu0 0.0
        %797 = vmatprep.subr.mxu0 0.0
        %798 = vmatpush1.msra.mxu0 0.0
        %799 = vmatprep.subr.mxu0 0.0
        %800 = vmatpush1.msra.mxu0 0.0
        %801 = vmatprep.subr.mxu0 0.0
        %802 = vmatpush1.msra.mxu0 0.0
        %803 = vmatprep.subr.mxu0 0.0
        %804 = vmatpush1.msra.mxu0 0.0
        %805 = vmatprep.subr.mxu0 0.0
        %806 = vmatpush1.msra.mxu0 0.0
        %807 = vmatprep.subr.mxu0 0.0
        %808 = vmatpush1.msra.mxu0 0.0
        %809 = vmatprep.subr.mxu0 0.0
        %810 = vmatpush1.msra.mxu0 0.0
        %811 = vmatprep.mubr.f32.mxu0 0.0
        %812 = vmatmul.mubr.f32.gmra.mrb[0].mxu0 %v742
        %v813 = vpop.f32.mrb[0].mxu0
        %v814 = vadd.f32 0.0, %v813
        %v815 = vpop.f32.mrb[0].mxu0
        %816 = vmatprep.mubr.f32.mxu0 0.0
        %817 = vmatmul.mubr.f32.gmra.mrb[0].mxu0 %v745
        %v818 = vpop.f32.mrb[0].mxu0
        %v819 = vadd.f32 0.0, %v818
        %v820 = vpop.f32.mrb[0].mxu0
        %821 = vdwg.mxu0
        %v822 = vadd.f32 %v739, %v814
        %v823 = vadd.f32 %v740, %v819
        %824 = vst.msk [vmem:[#allocation4] sm:$0xff] %vm499, %v822
        %825 = vst.msk [vmem:[#allocation4 + $0x8] sm:$0xff] %vm499, %v823
        %v826 = vld [vmem:[#allocation3] sm:$0xff]
        %v827 = vld [vmem:[#allocation3 + $0x8] sm:$0xff]
        %v828 = vsel %vm637, %v736, 0.0
        %829 = vadd.xlane.f32.xlu0 %v828
        %v830 = vpop.xlane.xlu0 %829
        %v831 = vsel %vm637, %v738, 0.0
        %832 = vadd.xlane.f32.xlu0 %v831
        %v833 = vpop.xlane.xlu0 %832
        %v834 = vadd.f32 %v826, %v830
        %v835 = vadd.f32 %v827, %v833
        %vm836 = vcmask 7168
        %837 = vst.msk [vmem:[#allocation3] sm:$0xff] %vm836, %v834
        %838 = vst.msk [vmem:[#allocation3 + $0x8] sm:$0xff] %vm836, %v835
        %v839 = vld [vmem:[#allocation2] sm:$0xff]
        %v840 = vld [vmem:[#allocation2 + $0x8] sm:$0xff]
        %v841 = vsel %vm637, %v633, 0.0
        %842 = vadd.xlane.f32.xlu0 %v841
        %v843 = vpop.xlane.xlu0 %842
        %v844 = vsel %vm637, %v634, 0.0
        %845 = vadd.xlane.f32.xlu0 %v844
        %v846 = vpop.xlane.xlu0 %845
        %v847 = vadd.f32 %v839, %v843
        %v848 = vadd.f32 %v840, %v846
        %849 = vst.msk [vmem:[#allocation2] sm:$0xff] %vm836, %v847
        %850 = vst.msk [vmem:[#allocation2 + $0x8] sm:$0xff] %vm836, %v848
      $region52: #{tpu_custom_call.1} parent=43 // pred_fallthru
        _
      %p851 = scmp.eq.s32.totalorder %s26, 3
      // Predicated region
      $region53: #{tpu_custom_call.1} parent=43 // pred_check
        %p852 = pneg %p851
      $region54: #{tpu_custom_call.1} parent=43 // pred_check_branch
        %854 = sbr.rel (%p852) target = $region56
      $region55: #{tpu_custom_call.1} parent=43 // pred_region
        %v855 = vld [vmem:[#allocation3] sm:$0xff]
        %v856 = vld [vmem:[#allocation3 + $0x8] sm:$0xff]
        %v857 = vsub.f32 1.0, %v855
        %v858 = vsub.f32 1.0, %v856
        %v859 = vld [vmem:[#allocation4] sm:$0xff]
        %v860 = vld [vmem:[#allocation4 + $0x8] sm:$0xff]
        %v861 = vld [vmem:[%s453] sm:$0x1]
        %863 = vset.pattern.permute.xlu0 0
        %864 = vperm.xlu0 %863, %v857
        %v865 = vpop.permute.xlu0 %864
        %868 = vset.pattern.permute.xlu0 0
        %869 = vperm.xlu0 %868, %v858
        %v870 = vpop.permute.xlu0 %869
        %v873 = vlaneseq
        %v874 = vshrl.u32 %v873, 7
        %v875 = vsub.s32 0, %v874
        %v876 = vrot.slane %v861, %v875
        %v878 = vmul.f32 %v865, %v876
        %v879 = vmul.f32 %v870, %v876
        %v880 = vadd.f32 %v859, %v878
        %v881 = vadd.f32 %v860, %v879
        %v882 = vmul.f32 %v880, %v880
        %v883 = vmul.f32 %v881, %v881
        %vm884 = vcmask 64512
        %v885 = vsel %vm884, %v882, 0.0
        %886 = vadd.xlane.f32.xlu0 %v885
        %v887 = vpop.xlane.xlu0 %886
        %v888 = vsel %vm884, %v883, 0.0
        %889 = vadd.xlane.f32.xlu0 %v888
        %v890 = vpop.xlane.xlu0 %889
        %v891 = vrcp.pop 8.0
        %v892 = vmul.f32 %v887, %v891
        %v893 = vmul.f32 %v890, %v891
        %v894 = vadd.f32 %v892, 1e-06
        %v895 = vadd.f32 %v893, 1e-06
        %v896 = vrsqrt.pop %v894
        %v897 = vrsqrt.pop %v895
        %v898 = vmul.f32 %v880, %v896
        %v899 = vmul.f32 %v881, %v897
        %v900 = vld [vmem:[%s456] sm:$0x1]
        %v902 = vlaneseq
        %v903 = vshrl.u32 %v902, 7
        %v904 = vsub.s32 0, %v903
        %v905 = vrot.slane %v900, %v904
        %v907 = vmul.f32 %v898, %v905
        %v908 = vmul.f32 %v899, %v905
        %909 = vst.msk [vmem:[%s469] sm:$0xff] %vm884, %v907
        %910 = vst.msk [vmem:[%s469 + $0x8] sm:$0xff] %vm884, %v908
      $region56: #{tpu_custom_call.1} parent=43 // pred_fallthru
        _
      %s911 = smul.u32 2, %s25
      %p912 = scmp.lt.s32.totalorder %s23, 1
      %s913 = scalar_select %p912, %s23, 1
      %p914 = scmp.lt.s32.totalorder %s24, 3
      %s915 = scalar_select %p914, %s24, 3
      %p916 = scmp.lt.s32.totalorder %s911, 7
      %s917 = scalar_select %p916, %s911, 7
      %s918 = smul.addr %s915, 8
      %s919 = sadd.s32 %s917, %s918
      %s920 = smul.addr %s913, 32
      %s921 = sadd.s32 %s919, %s920
      %s922 = smul.addr %s921, 8
      %s923 = scalar_lea.vmem %s6, %s922
      // Predicated region
      $region57: #{tpu_custom_call.1} parent=43 // pred_check
        %p924 = pneg %p232
      $region58: #{tpu_custom_call.1} parent=43 // pred_check_branch
        %926 = sbr.rel (%p924) target = $region60
      $region59: #{tpu_custom_call.1} parent=43 // pred_region
        %s927 = smul.u32 2, %s25
      $region60: #{tpu_custom_call.1} parent=43 // pred_fallthru
        _
    $region44: #{tpu_custom_call.1} parent=5 // pred_fallthru
      _
    %p928 = scmp.le.s32.totalorder 2, %s12
    // Predicated region
    $region61: #{tpu_custom_call.1} parent=5 // pred_check
      %p929 = pneg %p928
    $region62: #{tpu_custom_call.1} parent=5 // pred_check_branch
      %931 = sbr.rel (%p929) target = $region64
    $region63: #{tpu_custom_call.1} parent=5 // pred_region
      %s932 = ssub.s32 %s12, 2
      // Predicated region
      $region65: #{tpu_custom_call.1} parent=63 // pred_check
        %p933 = pneg %p238
      $region66: #{tpu_custom_call.1} parent=63 // pred_check_branch
        %935 = sbr.rel (%p933) target = $region68
      $region67: #{tpu_custom_call.1} parent=63 // pred_region
        %s936 = smul.u32 2, %s29
        %p937 = scmp.lt.s32.totalorder %s27, 1
        %s938 = scalar_select %p937, %s27, 1
        %p939 = scmp.lt.s32.totalorder %s28, 3
        %s940 = scalar_select %p939, %s28, 3
        %p941 = scmp.lt.s32.totalorder %s936, 7
        %s942 = scalar_select %p941, %s936, 7
        %s943 = smul.addr %s940, 8
        %s944 = sadd.s32 %s942, %s943
        %s945 = smul.addr %s938, 32
        %s946 = sadd.s32 %s944, %s945
        %s947 = smul.addr %s946, 8
        %s948 = scalar_lea.vmem %s6, %s947
      $region68: #{tpu_custom_call.1} parent=63 // pred_fallthru
        _
    $region64: #{tpu_custom_call.1} parent=5 // pred_fallthru
      _
  $region6: #{tpu_custom_call.1} parent=0 // loop_footer
    %s16 = sadd.s32 1, %s12
  $region7: #{tpu_custom_call.1} parent=0 // loop_footer_branch
    %11 = sbr.rel target = $region3
  $region8: #{tpu_custom_call.1} parent=0 // loop_exit
    _

</llo_original>
